<compile_context>
chip_gen: v5e
topology: v5e:2x2
jax: 0.10.0
libtpu: 0.0.40
codegen_flags: <defaults>
</compile_context>

<pallas_src>
import jax
import jax.numpy as jnp
from jax.experimental import pallas as pl
from jax.experimental.pallas import tpu as pltpu


def mlp_kernel(x_ref, w1_ref, b1_ref, w2_ref, b2_ref, o_ref):
    # Weights / biases: loaded once per grid step (blocks are VMEM-resident
    # thanks to the constant index_maps).  Biases stay f32.
    w1 = w1_ref[...]
    w2 = w2_ref[...]
    b1 = b1_ref[...]          # (1, H)  -> broadcasts over batch sublanes
    b2 = b2_ref[...]          # (1, act_dim)

    # Hidden layer: MXU matmul (operands in the weight dtype: f32 or bf16),
    # f32 accumulation, bias + tanh in f32 (v5e-safe).
    x = x_ref[...].astype(w1.dtype)
    h = jnp.dot(x, w1, preferred_element_type=jnp.float32)
    h = jnp.tanh(h + b1)

    # Output layer: no activation.
    out = jnp.dot(h.astype(w2.dtype), w2, preferred_element_type=jnp.float32)
    o_ref[...] = (out + b2).astype(o_ref.dtype)


def mlp_forward(x, w1, b1, w2, b2, *, block_b=512, use_bf16_matmul=False):
    """Forward pass of the 2-layer tanh MLP as a single pallas_call.

    x:  (B, obs_dim) f32
    w1: (obs_dim, H) f32     b1: (1, H) f32
    w2: (H, act_dim) f32     b2: (1, act_dim) f32
    """
    B, obs_dim = x.shape
    hidden = w1.shape[1]
    act_dim = w2.shape[1]
    assert w1.shape == (obs_dim, hidden) and b1.shape == (1, hidden)
    assert w2.shape == (hidden, act_dim) and b2.shape == (1, act_dim)

    if use_bf16_matmul:
        # Cast weights once in the wrapper (halves weight DMA); the kernel
        # casts x / h to the weight dtype for the dots only.
        w1 = w1.astype(jnp.bfloat16)
        w2 = w2.astype(jnp.bfloat16)

    # Batch tile: multiple of 8 (sublane granularity), at most block_b rows.
    tb = min(block_b, max(8, B))
    tb = pl.cdiv(tb, 8) * 8
    padded_b = pl.cdiv(B, tb) * tb
    if padded_b != B:
        x = jnp.pad(x, ((0, padded_b - B), (0, 0)))
    grid = (padded_b // tb,)

    out = pl.pallas_call(
        mlp_kernel,
        out_shape=jax.ShapeDtypeStruct((padded_b, act_dim), x.dtype),
        grid_spec=pltpu.PrefetchScalarGridSpec(
            num_scalar_prefetch=0,
            grid=grid,
            in_specs=[
                # x: tiled along batch, pipelined (double-buffered) per step.
                pl.BlockSpec((tb, obs_dim), lambda i: (i, 0)),
                # Weights / biases: full blocks, constant index -> VMEM-resident.
                pl.BlockSpec((obs_dim, hidden), lambda i: (0, 0)),
                pl.BlockSpec((1, hidden), lambda i: (0, 0)),
                pl.BlockSpec((hidden, act_dim), lambda i: (0, 0)),
                pl.BlockSpec((1, act_dim), lambda i: (0, 0)),
            ],
            out_specs=pl.BlockSpec((tb, act_dim), lambda i: (i, 0)),
        ),
        compiler_params=pltpu.CompilerParams(
            dimension_semantics=("parallel",),  # batch axis -> megacore split
        ),
    )(x, w1, b1, w2, b2)

    return out[:B]


def init_params(key, obs_dim, sizes):
    """Deterministic PyTorch-style init: U(-1/sqrt(fan_in), 1/sqrt(fan_in))."""
    dims = [obs_dim] + sizes
    params = []
    for i in range(len(dims) - 1):
        fan_in, fan_out = dims[i], dims[i + 1]
        key, kw, kb = jax.random.split(key, 3)
        bound = 1.0 / jnp.sqrt(fan_in)
        w = jax.random.uniform(kw, (fan_in, fan_out), jnp.float32, -bound, bound)
        b = jax.random.uniform(kb, (1, fan_out), jnp.float32, -bound, bound)
        params.append((w, b))
    return params


if __name__ == "__main__":
    # Spinup policy MLP: obs_dim=4, sizes=[32, 2] -> Linear(4,32)->Tanh->Linear(32,2)
    obs_dim, hidden, act_dim = 4, 32, 2
    # Batch sized like a whole rollout of observations (amortizes launch
    # overhead) and deliberately NOT a multiple of the 512-row tile, to
    # exercise the padding path.  Still only ~16 KB of input.
    batch = 1000

    key = jax.random.PRNGKey(0)
    key, kx = jax.random.split(key)
    x = jax.random.normal(kx, (batch, obs_dim), jnp.float32)
    (w1, b1), (w2, b2) = init_params(key, obs_dim, [hidden, act_dim])

    # Pure-JAX f32 reference of the same forward semantics.
    ref = jnp.tanh(x @ w1 + b1) @ w2 + b2

    # 1) Exact-semantics f32 path (matches PyTorch numerics).
    out = jax.block_until_ready(mlp_forward(x, w1, b1, w2, b2))
    assert out.shape == (batch, act_dim)
    assert jnp.allclose(out, ref, atol=1e-5, rtol=1e-5)

    # 2) bf16-matmul throughput path (f32 accumulation, f32 tanh/bias).
    out_bf16 = jax.block_until_ready(
        mlp_forward(x, w1, b1, w2, b2, use_bf16_matmul=True))
    assert out_bf16.shape == (batch, act_dim)
    assert jnp.allclose(out_bf16, ref, atol=5e-2, rtol=5e-2)

    # 3) Tiny-batch path (B < tile, not launch-efficient but must stay correct).
    xs = x[:8]
    out_small = jax.block_until_ready(mlp_forward(xs, w1, b1, w2, b2))
    assert jnp.allclose(out_small, ref[:8], atol=1e-5, rtol=1e-5)

    print("KERNEL_OK")
</pallas_src>

<mosaic_0001>
module attributes {stable_mosaic.version = 11 : i64} {
  func.func @mlp_kernel(%arg0: i32, %arg1: memref<512x4xf32, #tpu.memory_space<vmem>>, %arg2: memref<4x32xf32, #tpu.memory_space<vmem>>, %arg3: memref<1x32xf32, #tpu.memory_space<vmem>>, %arg4: memref<32x2xf32, #tpu.memory_space<vmem>>, %arg5: memref<1x2xf32, #tpu.memory_space<vmem>>, %arg6: memref<512x2xf32, #tpu.memory_space<vmem>>) attributes {dimension_semantics = [#tpu.dimension_semantics<parallel>], iteration_bounds = array<i64: 2>, scalar_prefetch = 0 : i64, scratch_operands = 0 : i64, tpu.core_type = #tpu.core_type<tc>, window_params = [{transform_indices = @transform_0, window_bounds = array<i64: 512, 4>}, {pipeline_mode = #tpu.pipeline_mode<synchronous>, transform_indices = @transform_1, window_bounds = array<i64: 4, 32>}, {pipeline_mode = #tpu.pipeline_mode<synchronous>, transform_indices = @transform_2, window_bounds = array<i64: 1, 32>}, {pipeline_mode = #tpu.pipeline_mode<synchronous>, transform_indices = @transform_3, window_bounds = array<i64: 32, 2>}, {pipeline_mode = #tpu.pipeline_mode<synchronous>, transform_indices = @transform_4, window_bounds = array<i64: 1, 2>}, {transform_indices = @transform_5, window_bounds = array<i64: 512, 2>}]} {
    %c0 = arith.constant 0 : index
    %c0_0 = arith.constant 0 : index
    %0 = vector.load %arg2[%c0, %c0_0] : memref<4x32xf32, #tpu.memory_space<vmem>>, vector<4x32xf32>
    %c0_1 = arith.constant 0 : index
    %c0_2 = arith.constant 0 : index
    %1 = vector.load %arg4[%c0_1, %c0_2] : memref<32x2xf32, #tpu.memory_space<vmem>>, vector<32x2xf32>
    %c0_3 = arith.constant 0 : index
    %c0_4 = arith.constant 0 : index
    %2 = vector.load %arg3[%c0_3, %c0_4] : memref<1x32xf32, #tpu.memory_space<vmem>>, vector<1x32xf32>
    %c0_5 = arith.constant 0 : index
    %c0_6 = arith.constant 0 : index
    %3 = vector.load %arg5[%c0_5, %c0_6] : memref<1x2xf32, #tpu.memory_space<vmem>>, vector<1x2xf32>
    %c0_7 = arith.constant 0 : index
    %c0_8 = arith.constant 0 : index
    %4 = vector.load %arg1[%c0_7, %c0_8] : memref<512x4xf32, #tpu.memory_space<vmem>>, vector<512x4xf32>
    %cst = arith.constant dense<0.000000e+00> : vector<512x32xf32>
    %5 = tpu.matmul %4, %0, %cst {dimension_numbers = #tpu.dot_dimension_numbers<[1], [0], [0], [1], [0, 0, 1, 1], [], []>} : vector<512x4xf32>, vector<4x32xf32>, vector<512x32xf32> -> vector<512x32xf32>
    %6 = vector.broadcast %2 : vector<1x32xf32> to vector<512x32xf32>
    %7 = arith.addf %5, %6 : vector<512x32xf32>
    %8 = math.tanh %7 : vector<512x32xf32>
    %cst_9 = arith.constant dense<0.000000e+00> : vector<512x2xf32>
    %9 = tpu.matmul %8, %1, %cst_9 {dimension_numbers = #tpu.dot_dimension_numbers<[1], [0], [0], [1], [0, 0, 1, 1], [], []>} : vector<512x32xf32>, vector<32x2xf32>, vector<512x2xf32> -> vector<512x2xf32>
    %10 = vector.broadcast %3 : vector<1x2xf32> to vector<512x2xf32>
    %11 = arith.addf %9, %10 : vector<512x2xf32>
    %c0_10 = arith.constant 0 : index
    %c0_11 = arith.constant 0 : index
    %12 = vector.load %arg6[%c0_10, %c0_11] : memref<512x2xf32, #tpu.memory_space<vmem>>, vector<512x2xf32>
    tpu.vector_store %arg6[%c0_10, %c0_11], %11 {strides = array<i32>} : memref<512x2xf32, #tpu.memory_space<vmem>>, vector<512x2xf32>,
    return
  }
  func.func @transform_0(%arg0: i32) -> (i32, i32) {
    %c0_i32 = arith.constant 0 : i32
    %c0_i32_0 = arith.constant 0 : i32
    return %arg0, %c0_i32 : i32, i32
  }
  func.func @transform_1(%arg0: i32) -> (i32, i32) {
    %c0_i32 = arith.constant 0 : i32
    %c0_i32_0 = arith.constant 0 : i32
    %c0_i32_1 = arith.constant 0 : i32
    return %c0_i32, %c0_i32_0 : i32, i32
  }
  func.func @transform_2(%arg0: i32) -> (i32, i32) {
    %c0_i32 = arith.constant 0 : i32
    %c0_i32_0 = arith.constant 0 : i32
    %c0_i32_1 = arith.constant 0 : i32
    return %c0_i32, %c0_i32_0 : i32, i32
  }
  func.func @transform_3(%arg0: i32) -> (i32, i32) {
    %c0_i32 = arith.constant 0 : i32
    %c0_i32_0 = arith.constant 0 : i32
    %c0_i32_1 = arith.constant 0 : i32
    return %c0_i32, %c0_i32_0 : i32, i32
  }
  func.func @transform_4(%arg0: i32) -> (i32, i32) {
    %c0_i32 = arith.constant 0 : i32
    %c0_i32_0 = arith.constant 0 : i32
    %c0_i32_1 = arith.constant 0 : i32
    return %c0_i32, %c0_i32_0 : i32, i32
  }
  func.func @transform_5(%arg0: i32) -> (i32, i32) {
    %c0_i32 = arith.constant 0 : i32
    %c0_i32_0 = arith.constant 0 : i32
    return %arg0, %c0_i32 : i32, i32
  }
}

</mosaic_0001>

<llo_original>
// kernel: tpu_custom_call.1
$region0: #{tpu_custom_call.1}
  #allocation0 [shape = 'u32[]', space=smem, size = 0x4, offset = 0x4, fixed_abs, tag = 'smem constant byte address 0x4 - core index']
  #allocation1 [shape = 'u32[72,128]{1,0:T(1,128)}', space=vmem, size = 0x9000, scoped, tag = 'internal scratch']
  %s0 = inlined_call_operand.vmem [shape: f32[1024,4], index: 0, kind: input, shape index: {}]
  %s1 = inlined_call_operand.vmem [shape: f32[4,32], index: 1, kind: input, shape index: {}]
  %s2 = inlined_call_operand.vmem [shape: f32[1,32], index: 2, kind: input, shape index: {}]
  %s3 = inlined_call_operand.vmem [shape: f32[32,2], index: 3, kind: input, shape index: {}]
  %s4 = inlined_call_operand.vmem [shape: f32[1,2], index: 4, kind: input, shape index: {}]
  %s5 = inlined_call_operand.vmem [shape: f32[1024,2], index: 5, kind: output, shape index: {}]
  %s6 = sld [smem:[#allocation0]]
  $region53: #{tpu_custom_call.1} parent=0
    _
  %s8 = ssub.s32 1, %s6
  %s9 = scalar_select 0, %s8, %s6
  loop: start=0, step=1, limit=4
  $region2: #{tpu_custom_call.1} parent=0 // loop_pre_header
    _
  $region3: #{tpu_custom_call.1} parent=0 // loop_header
    %s11 = sphi 0, %s15
    %p12 = scmp.ge.s32.totalorder %s11, 4
    %s21 = sphi 0, %s23
    %s24 = sphi 0, %s21
    %s25 = sphi 0, %s24
    %s41 = sphi 0, %s25
    %s45 = sphi 0, %s45
    %s47 = sphi 0, %s45
    %s48 = sphi 0, %s47
    %s62 = sphi 0, %s48
    %s66 = sphi 0, %s66
    %s68 = sphi 0, %s66
    %s69 = sphi 0, %s68
    %s83 = sphi 0, %s69
    %s87 = sphi 0, %s87
    %s89 = sphi 0, %s87
    %s90 = sphi 0, %s89
    %s104 = sphi 0, %s90
    %s108 = sphi 0, %s108
    %s110 = sphi 0, %s108
    %s111 = sphi 0, %s110
    %s125 = sphi 0, %s111
    %s131 = sphi 0, %s133
    %s134 = sphi 0, %s131
    %s135 = sphi 0, %s134
    %s151 = sphi 0, %s135
  $region4: #{tpu_custom_call.1} parent=0 // loop_header_branch
    %14 = sbr.rel (%p12) target = $region8
  $region5: #{tpu_custom_call.1} parent=0 // loop_body
    %s16 = ssub.s32 %s11, 1
    %s17 = ssub.s32 %s11, 2
    %s18 = sadd.s32 %s11, 1
    %s19 = ssub.s32 %s11, %s18
    %p20 = scmp.eq.s32.totalorder %s19, 0
    %s22 = sadd.s32 %s21, 1
    %s23 = scalar_select %p20, %s21, %s22
    %p26 = pneg %p20
    %p27 = scmp.eq.s32.totalorder %s11, 1
    %p28 = por %p26, %p27
    %p29 = scmp.ne.s32.totalorder %s21, %s24
    %p30 = scmp.eq.s32.totalorder %s11, 0
    %p31 = por %p29, %p30
    %p32 = scmp.ne.s32.totalorder %s21, %s24
    %p33 = scmp.eq.s32.totalorder %s16, 1
    %p34 = por %p32, %p33
    %p35 = scmp.ne.s32.totalorder %s24, %s25
    %p36 = scmp.eq.s32.totalorder %s16, 0
    %p37 = por %p35, %p36
    %p38 = scmp.ne.s32.totalorder %s24, %s25
    %p39 = scmp.eq.s32.totalorder %s17, 1
    %p40 = por %p38, %p39
    %p42 = scmp.ne.s32.totalorder %s25, %s41
    %p43 = scmp.eq.s32.totalorder %s17, 0
    %p44 = por %p42, %p43
    %s46 = sadd.s32 %s45, 1
    %p49 = scmp.eq.s32.totalorder %s11, 1
    %p50 = scmp.ne.s32.totalorder %s45, %s47
    %p51 = scmp.eq.s32.totalorder %s11, 0
    %p52 = por %p50, %p51
    %p53 = scmp.ne.s32.totalorder %s45, %s47
    %p54 = scmp.eq.s32.totalorder %s16, 1
    %p55 = por %p53, %p54
    %p56 = scmp.ne.s32.totalorder %s47, %s48
    %p57 = scmp.eq.s32.totalorder %s16, 0
    %p58 = por %p56, %p57
    %p59 = scmp.ne.s32.totalorder %s47, %s48
    %p60 = scmp.eq.s32.totalorder %s17, 1
    %p61 = por %p59, %p60
    %p63 = scmp.ne.s32.totalorder %s48, %s62
    %p64 = scmp.eq.s32.totalorder %s17, 0
    %p65 = por %p63, %p64
    %s67 = sadd.s32 %s66, 1
    %p70 = scmp.eq.s32.totalorder %s11, 1
    %p71 = scmp.ne.s32.totalorder %s66, %s68
    %p72 = scmp.eq.s32.totalorder %s11, 0
    %p73 = por %p71, %p72
    %p74 = scmp.ne.s32.totalorder %s66, %s68
    %p75 = scmp.eq.s32.totalorder %s16, 1
    %p76 = por %p74, %p75
    %p77 = scmp.ne.s32.totalorder %s68, %s69
    %p78 = scmp.eq.s32.totalorder %s16, 0
    %p79 = por %p77, %p78
    %p80 = scmp.ne.s32.totalorder %s68, %s69
    %p81 = scmp.eq.s32.totalorder %s17, 1
    %p82 = por %p80, %p81
    %p84 = scmp.ne.s32.totalorder %s69, %s83
    %p85 = scmp.eq.s32.totalorder %s17, 0
    %p86 = por %p84, %p85
    %s88 = sadd.s32 %s87, 1
    %p91 = scmp.eq.s32.totalorder %s11, 1
    %p92 = scmp.ne.s32.totalorder %s87, %s89
    %p93 = scmp.eq.s32.totalorder %s11, 0
    %p94 = por %p92, %p93
    %p95 = scmp.ne.s32.totalorder %s87, %s89
    %p96 = scmp.eq.s32.totalorder %s16, 1
    %p97 = por %p95, %p96
    %p98 = scmp.ne.s32.totalorder %s89, %s90
    %p99 = scmp.eq.s32.totalorder %s16, 0
    %p100 = por %p98, %p99
    %p101 = scmp.ne.s32.totalorder %s89, %s90
    %p102 = scmp.eq.s32.totalorder %s17, 1
    %p103 = por %p101, %p102
    %p105 = scmp.ne.s32.totalorder %s90, %s104
    %p106 = scmp.eq.s32.totalorder %s17, 0
    %p107 = por %p105, %p106
    %s109 = sadd.s32 %s108, 1
    %p112 = scmp.eq.s32.totalorder %s11, 1
    %p113 = scmp.ne.s32.totalorder %s108, %s110
    %p114 = scmp.eq.s32.totalorder %s11, 0
    %p115 = por %p113, %p114
    %p116 = scmp.ne.s32.totalorder %s108, %s110
    %p117 = scmp.eq.s32.totalorder %s16, 1
    %p118 = por %p116, %p117
    %p119 = scmp.ne.s32.totalorder %s110, %s111
    %p120 = scmp.eq.s32.totalorder %s16, 0
    %p121 = por %p119, %p120
    %p122 = scmp.ne.s32.totalorder %s110, %s111
    %p123 = scmp.eq.s32.totalorder %s17, 1
    %p124 = por %p122, %p123
    %p126 = scmp.ne.s32.totalorder %s111, %s125
    %p127 = scmp.eq.s32.totalorder %s17, 0
    %p128 = por %p126, %p127
    %s129 = ssub.s32 %s11, %s18
    %p130 = scmp.eq.s32.totalorder %s129, 0
    %s132 = sadd.s32 %s131, 1
    %s133 = scalar_select %p130, %s131, %s132
    %p136 = pneg %p130
    %p137 = scmp.eq.s32.totalorder %s11, 1
    %p138 = por %p136, %p137
    %p139 = scmp.ne.s32.totalorder %s131, %s134
    %p140 = scmp.eq.s32.totalorder %s11, 0
    %p141 = por %p139, %p140
    %p142 = scmp.ne.s32.totalorder %s131, %s134
    %p143 = scmp.eq.s32.totalorder %s16, 1
    %p144 = por %p142, %p143
    %p145 = scmp.ne.s32.totalorder %s134, %s135
    %p146 = scmp.eq.s32.totalorder %s16, 0
    %p147 = por %p145, %p146
    %p148 = scmp.ne.s32.totalorder %s134, %s135
    %p149 = scmp.eq.s32.totalorder %s17, 1
    %p150 = por %p148, %p149
    %p152 = scmp.ne.s32.totalorder %s135, %s151
    %p153 = scmp.eq.s32.totalorder %s17, 0
    %p154 = por %p152, %p153
    %p155 = scmp.le.s32.totalorder 1, %s11
    %p156 = scmp.lt.s32.totalorder %s11, 3
    %p157 = pnand %p155, %p156
    %p158 = pneg %p157
    // Predicated region
    $region9: #{tpu_custom_call.1} parent=5 // pred_check
      _
    $region10: #{tpu_custom_call.1} parent=5 // pred_check_branch
      %160 = sbr.rel (%p157) target = $region12
    $region11: #{tpu_custom_call.1} parent=5 // pred_region
      %s161 = ssub.s32 %s11, 1
      // Predicated region
      $region13: #{tpu_custom_call.1} parent=11 // pred_check
        %p162 = pneg %p58
      $region14: #{tpu_custom_call.1} parent=11 // pred_check_branch
        %164 = sbr.rel (%p162) target = $region16
      $region15: #{tpu_custom_call.1} parent=11 // pred_region
        _
      $region16: #{tpu_custom_call.1} parent=11 // pred_fallthru
        _
      // Predicated region
      $region17: #{tpu_custom_call.1} parent=11 // pred_check
        %p165 = pneg %p79
      $region18: #{tpu_custom_call.1} parent=11 // pred_check_branch
        %167 = sbr.rel (%p165) target = $region20
      $region19: #{tpu_custom_call.1} parent=11 // pred_region
        _
      $region20: #{tpu_custom_call.1} parent=11 // pred_fallthru
        _
      // Predicated region
      $region21: #{tpu_custom_call.1} parent=11 // pred_check
        %p168 = pneg %p100
      $region22: #{tpu_custom_call.1} parent=11 // pred_check_branch
        %170 = sbr.rel (%p168) target = $region24
      $region23: #{tpu_custom_call.1} parent=11 // pred_region
        _
      $region24: #{tpu_custom_call.1} parent=11 // pred_fallthru
        _
      // Predicated region
      $region25: #{tpu_custom_call.1} parent=11 // pred_check
        %p171 = pneg %p121
      $region26: #{tpu_custom_call.1} parent=11 // pred_check_branch
        %173 = sbr.rel (%p171) target = $region28
      $region27: #{tpu_custom_call.1} parent=11 // pred_region
        _
      $region28: #{tpu_custom_call.1} parent=11 // pred_fallthru
        _
    $region12: #{tpu_custom_call.1} parent=5 // pred_fallthru
      _
    %p174 = scmp.lt.s32.totalorder %s11, 2
    // Predicated region
    $region29: #{tpu_custom_call.1} parent=5 // pred_check
      %p175 = pneg %p174
    $region30: #{tpu_custom_call.1} parent=5 // pred_check_branch
      %177 = sbr.rel (%p175) target = $region32
    $region31: #{tpu_custom_call.1} parent=5 // pred_region
      // Predicated region
      $region33: #{tpu_custom_call.1} parent=31 // pred_check
        %p178 = pneg %p31
      $region34: #{tpu_custom_call.1} parent=31 // pred_check_branch
        %180 = sbr.rel (%p178) target = $region36
      $region35: #{tpu_custom_call.1} parent=31 // pred_region
        %s181 = smul.u32 64, %s11
        %p182 = scmp.lt.s32.totalorder %s181, 127
        %s183 = scalar_select %p182, %s181, 127
        %s184 = smul.addr %s183, 8
        %s185 = scalar_lea.vmem %s0, %s184
        %s186 = smul.u32 64, %s11
      $region36: #{tpu_custom_call.1} parent=31 // pred_fallthru
        _
    $region32: #{tpu_custom_call.1} parent=5 // pred_fallthru
      _
    %p187 = scmp.le.s32.totalorder 1, %s11
    %p188 = scmp.lt.s32.totalorder %s11, 3
    %p189 = pnand %p187, %p188
    %p190 = pneg %p189
    // Predicated region
    $region37: #{tpu_custom_call.1} parent=5 // pred_check
      _
    $region38: #{tpu_custom_call.1} parent=5 // pred_check_branch
      %192 = sbr.rel (%p189) target = $region40
    $region39: #{tpu_custom_call.1} parent=5 // pred_region
      %s193 = ssub.s32 %s11, 1
      %s194 = smul.u32 64, %s16
      %p195 = scmp.lt.s32.totalorder %s194, 127
      %s196 = scalar_select %p195, %s194, 127
      %s197 = smul.addr %s196, 8
      %s198 = scalar_lea.vmem %s0, %s197
      %p199 = pneg %p37
      %p200 = pneg %p34
      %p201 = pneg %p58
      %p202 = pneg %p55
      %p203 = pneg %p79
      %p204 = pneg %p76
      %p205 = pneg %p100
      %p206 = pneg %p97
      %p207 = pneg %p121
      %p208 = pneg %p118
      %p209 = pneg %p147
      %p210 = pneg %p144
      %s211 = smul.u32 64, %s16
      %p212 = scmp.lt.s32.totalorder %s211, 127
      %s213 = scalar_select %p212, %s211, 127
      %s214 = smul.addr %s213, 8
      %s215 = scalar_lea.vmem %s5, %s214
      %s216 = smul.u32 64, %s16
      %p217 = scmp.lt.s32.totalorder %s216, 127
      %s218 = scalar_select %p217, %s216, 127
      %s219 = smul.addr %s218, 8
      %s220 = scalar_lea.vmem %s0, %s219
      %s221 = smul.u32 64, %s16
      %s222 = smul.u32 64, %s16
      %p223 = scmp.lt.s32.totalorder %s222, 127
      %s224 = scalar_select %p223, %s222, 127
      %s225 = smul.addr %s224, 8
      %s226 = scalar_lea.vmem %s5, %s225
      %s227 = smul.u32 64, %s16
      %v228 = vld [vmem:[%s1] sm:$0xf]
      %v229 = vld [vmem:[%s3] sm:$0xff]
      %v230 = vld [vmem:[%s3 + $0x8] sm:$0xff]
      %v231 = vld [vmem:[%s3 + $0x10] sm:$0xff]
      %v232 = vld [vmem:[%s3 + $0x18] sm:$0xff]
      %v233 = vld [vmem:[%s2] sm:$0x1]
      %v234 = vld [vmem:[%s4] sm:$0x1]
      %v235 = vld [vmem:[%s220] sm:$0xff]
      %v236 = vld [vmem:[%s220 + $0x8] sm:$0xff]
      %v237 = vld [vmem:[%s220 + $0x10] sm:$0xff]
      %v238 = vld [vmem:[%s220 + $0x18] sm:$0xff]
      %v239 = vld [vmem:[%s220 + $0x20] sm:$0xff]
      %v240 = vld [vmem:[%s220 + $0x28] sm:$0xff]
      %v241 = vld [vmem:[%s220 + $0x30] sm:$0xff]
      %v242 = vld [vmem:[%s220 + $0x38] sm:$0xff]
      %v243 = vld [vmem:[%s220 + $0x40] sm:$0xff]
      %v244 = vld [vmem:[%s220 + $0x48] sm:$0xff]
      %v245 = vld [vmem:[%s220 + $0x50] sm:$0xff]
      %v246 = vld [vmem:[%s220 + $0x58] sm:$0xff]
      %v247 = vld [vmem:[%s220 + $0x60] sm:$0xff]
      %v248 = vld [vmem:[%s220 + $0x68] sm:$0xff]
      %v249 = vld [vmem:[%s220 + $0x70] sm:$0xff]
      %v250 = vld [vmem:[%s220 + $0x78] sm:$0xff]
      %v251 = vld [vmem:[%s220 + $0x80] sm:$0xff]
      %v252 = vld [vmem:[%s220 + $0x88] sm:$0xff]
      %v253 = vld [vmem:[%s220 + $0x90] sm:$0xff]
      %v254 = vld [vmem:[%s220 + $0x98] sm:$0xff]
      %v255 = vld [vmem:[%s220 + $0xa0] sm:$0xff]
      %v256 = vld [vmem:[%s220 + $0xa8] sm:$0xff]
      %v257 = vld [vmem:[%s220 + $0xb0] sm:$0xff]
      %v258 = vld [vmem:[%s220 + $0xb8] sm:$0xff]
      %v259 = vld [vmem:[%s220 + $0xc0] sm:$0xff]
      %v260 = vld [vmem:[%s220 + $0xc8] sm:$0xff]
      %v261 = vld [vmem:[%s220 + $0xd0] sm:$0xff]
      %v262 = vld [vmem:[%s220 + $0xd8] sm:$0xff]
      %v263 = vld [vmem:[%s220 + $0xe0] sm:$0xff]
      %v264 = vld [vmem:[%s220 + $0xe8] sm:$0xff]
      %v265 = vld [vmem:[%s220 + $0xf0] sm:$0xff]
      %v266 = vld [vmem:[%s220 + $0xf8] sm:$0xff]
      %v267 = vld [vmem:[%s220 + $0x100] sm:$0xff]
      %v268 = vld [vmem:[%s220 + $0x108] sm:$0xff]
      %v269 = vld [vmem:[%s220 + $0x110] sm:$0xff]
      %v270 = vld [vmem:[%s220 + $0x118] sm:$0xff]
      %v271 = vld [vmem:[%s220 + $0x120] sm:$0xff]
      %v272 = vld [vmem:[%s220 + $0x128] sm:$0xff]
      %v273 = vld [vmem:[%s220 + $0x130] sm:$0xff]
      %v274 = vld [vmem:[%s220 + $0x138] sm:$0xff]
      %v275 = vld [vmem:[%s220 + $0x140] sm:$0xff]
      %v276 = vld [vmem:[%s220 + $0x148] sm:$0xff]
      %v277 = vld [vmem:[%s220 + $0x150] sm:$0xff]
      %v278 = vld [vmem:[%s220 + $0x158] sm:$0xff]
      %v279 = vld [vmem:[%s220 + $0x160] sm:$0xff]
      %v280 = vld [vmem:[%s220 + $0x168] sm:$0xff]
      %v281 = vld [vmem:[%s220 + $0x170] sm:$0xff]
      %v282 = vld [vmem:[%s220 + $0x178] sm:$0xff]
      %v283 = vld [vmem:[%s220 + $0x180] sm:$0xff]
      %v284 = vld [vmem:[%s220 + $0x188] sm:$0xff]
      %v285 = vld [vmem:[%s220 + $0x190] sm:$0xff]
      %v286 = vld [vmem:[%s220 + $0x198] sm:$0xff]
      %v287 = vld [vmem:[%s220 + $0x1a0] sm:$0xff]
      %v288 = vld [vmem:[%s220 + $0x1a8] sm:$0xff]
      %v289 = vld [vmem:[%s220 + $0x1b0] sm:$0xff]
      %v290 = vld [vmem:[%s220 + $0x1b8] sm:$0xff]
      %v291 = vld [vmem:[%s220 + $0x1c0] sm:$0xff]
      %v292 = vld [vmem:[%s220 + $0x1c8] sm:$0xff]
      %v293 = vld [vmem:[%s220 + $0x1d0] sm:$0xff]
      %v294 = vld [vmem:[%s220 + $0x1d8] sm:$0xff]
      %v295 = vld [vmem:[%s220 + $0x1e0] sm:$0xff]
      %v296 = vld [vmem:[%s220 + $0x1e8] sm:$0xff]
      %v297 = vld [vmem:[%s220 + $0x1f0] sm:$0xff]
      %v298 = vld [vmem:[%s220 + $0x1f8] sm:$0xff]
      %v300 = vperm.slane %v233, 0
      %vm302 = vcmask 31744
      %v304 = vsel %vm302, %v235, 0
      %v307 = vsel %vm302, %v236, 0
      %v310 = vsel %vm302, %v237, 0
      %v313 = vsel %vm302, %v238, 0
      %v316 = vsel %vm302, %v239, 0
      %v319 = vsel %vm302, %v240, 0
      %v322 = vsel %vm302, %v241, 0
      %v325 = vsel %vm302, %v242, 0
      %v328 = vsel %vm302, %v243, 0
      %v331 = vsel %vm302, %v244, 0
      %v334 = vsel %vm302, %v245, 0
      %v337 = vsel %vm302, %v246, 0
      %v340 = vsel %vm302, %v247, 0
      %v343 = vsel %vm302, %v248, 0
      %v346 = vsel %vm302, %v249, 0
      %v349 = vsel %vm302, %v250, 0
      %v352 = vsel %vm302, %v251, 0
      %v355 = vsel %vm302, %v252, 0
      %v358 = vsel %vm302, %v253, 0
      %v361 = vsel %vm302, %v254, 0
      %v364 = vsel %vm302, %v255, 0
      %v367 = vsel %vm302, %v256, 0
      %v370 = vsel %vm302, %v257, 0
      %v373 = vsel %vm302, %v258, 0
      %v376 = vsel %vm302, %v259, 0
      %v379 = vsel %vm302, %v260, 0
      %v382 = vsel %vm302, %v261, 0
      %v385 = vsel %vm302, %v262, 0
      %v388 = vsel %vm302, %v263, 0
      %v391 = vsel %vm302, %v264, 0
      %v394 = vsel %vm302, %v265, 0
      %v397 = vsel %vm302, %v266, 0
      %v400 = vsel %vm302, %v267, 0
      %v403 = vsel %vm302, %v268, 0
      %v406 = vsel %vm302, %v269, 0
      %v409 = vsel %vm302, %v270, 0
      %v412 = vsel %vm302, %v271, 0
      %v415 = vsel %vm302, %v272, 0
      %v418 = vsel %vm302, %v273, 0
      %v421 = vsel %vm302, %v274, 0
      %v424 = vsel %vm302, %v275, 0
      %v427 = vsel %vm302, %v276, 0
      %v430 = vsel %vm302, %v277, 0
      %v433 = vsel %vm302, %v278, 0
      %v436 = vsel %vm302, %v279, 0
      %v439 = vsel %vm302, %v280, 0
      %v442 = vsel %vm302, %v281, 0
      %v445 = vsel %vm302, %v282, 0
      %v448 = vsel %vm302, %v283, 0
      %v451 = vsel %vm302, %v284, 0
      %v454 = vsel %vm302, %v285, 0
      %v457 = vsel %vm302, %v286, 0
      %v460 = vsel %vm302, %v287, 0
      %v463 = vsel %vm302, %v288, 0
      %v466 = vsel %vm302, %v289, 0
      %v469 = vsel %vm302, %v290, 0
      %v472 = vsel %vm302, %v291, 0
      %v475 = vsel %vm302, %v292, 0
      %v478 = vsel %vm302, %v293, 0
      %v481 = vsel %vm302, %v294, 0
      %v484 = vsel %vm302, %v295, 0
      %v487 = vsel %vm302, %v296, 0
      %v490 = vsel %vm302, %v297, 0
      %v493 = vsel %vm302, %v298, 0
      %vm495 = vcmask 1043456
      %v497 = vsel %vm495, %v228, 0
      %499 = vmatpush.msra.mxu0 0.0
      %500 = vmatpush.msra.mxu0 0.0
      %501 = vmatpush.msra.mxu0 0.0
      %502 = vmatpush.msra.mxu0 0.0
      %503 = vmatpush.msra.mxu0 0.0
      %504 = vmatpush.msra.mxu0 0.0
      %505 = vmatpush.msra.mxu0 0.0
      %506 = vmatpush.msra.mxu0 0.0
      %507 = vmatpush.msra.mxu0 0.0
      %508 = vmatpush.msra.mxu0 0.0
      %509 = vmatpush.msra.mxu0 0.0
      %510 = vmatpush.msra.mxu0 0.0
      %511 = vmatpush.msra.mxu0 0.0
      %512 = vmatpush.msra.mxu0 0.0
      %513 = vmatpush.msra.mxu0 0.0
      %514 = vmatpush.msra.mxu0 %v497
      %515 = vmatmul.f32.gmra.mxu0 %v304
      %v516 = vpop.f32.mrf.mxu0
      %v517 = vadd.f32 %v300, %v516
      %518 = vmatmul.f32.gmra.mxu0 %v307
      %v519 = vpop.f32.mrf.mxu0
      %v520 = vadd.f32 %v300, %v519
      %521 = vmatmul.f32.gmra.mxu0 %v310
      %v522 = vpop.f32.mrf.mxu0
      %v523 = vadd.f32 %v300, %v522
      %524 = vmatmul.f32.gmra.mxu0 %v313
      %v525 = vpop.f32.mrf.mxu0
      %v526 = vadd.f32 %v300, %v525
      %527 = vmatmul.f32.gmra.mxu0 %v316
      %v528 = vpop.f32.mrf.mxu0
      %v529 = vadd.f32 %v300, %v528
      %530 = vmatmul.f32.gmra.mxu0 %v319
      %v531 = vpop.f32.mrf.mxu0
      %v532 = vadd.f32 %v300, %v531
      %533 = vmatmul.f32.gmra.mxu0 %v322
      %v534 = vpop.f32.mrf.mxu0
      %v535 = vadd.f32 %v300, %v534
      %536 = vmatmul.f32.gmra.mxu0 %v325
      %v537 = vpop.f32.mrf.mxu0
      %v538 = vadd.f32 %v300, %v537
      %539 = vmatmul.f32.gmra.mxu0 %v328
      %v540 = vpop.f32.mrf.mxu0
      %v541 = vadd.f32 %v300, %v540
      %542 = vmatmul.f32.gmra.mxu0 %v331
      %v543 = vpop.f32.mrf.mxu0
      %v544 = vadd.f32 %v300, %v543
      %545 = vmatmul.f32.gmra.mxu0 %v334
      %v546 = vpop.f32.mrf.mxu0
      %v547 = vadd.f32 %v300, %v546
      %548 = vmatmul.f32.gmra.mxu0 %v337
      %v549 = vpop.f32.mrf.mxu0
      %v550 = vadd.f32 %v300, %v549
      %551 = vmatmul.f32.gmra.mxu0 %v340
      %v552 = vpop.f32.mrf.mxu0
      %v553 = vadd.f32 %v300, %v552
      %554 = vmatmul.f32.gmra.mxu0 %v343
      %v555 = vpop.f32.mrf.mxu0
      %v556 = vadd.f32 %v300, %v555
      %557 = vmatmul.f32.gmra.mxu0 %v346
      %v558 = vpop.f32.mrf.mxu0
      %v559 = vadd.f32 %v300, %v558
      %560 = vmatmul.f32.gmra.mxu0 %v349
      %v561 = vpop.f32.mrf.mxu0
      %v562 = vadd.f32 %v300, %v561
      %563 = vmatmul.f32.gmra.mxu0 %v352
      %v564 = vpop.f32.mrf.mxu0
      %v565 = vadd.f32 %v300, %v564
      %566 = vmatmul.f32.gmra.mxu0 %v355
      %v567 = vpop.f32.mrf.mxu0
      %v568 = vadd.f32 %v300, %v567
      %569 = vmatmul.f32.gmra.mxu0 %v358
      %v570 = vpop.f32.mrf.mxu0
      %v571 = vadd.f32 %v300, %v570
      %572 = vmatmul.f32.gmra.mxu0 %v361
      %v573 = vpop.f32.mrf.mxu0
      %v574 = vadd.f32 %v300, %v573
      %575 = vmatmul.f32.gmra.mxu0 %v364
      %v576 = vpop.f32.mrf.mxu0
      %v577 = vadd.f32 %v300, %v576
      %578 = vmatmul.f32.gmra.mxu0 %v367
      %v579 = vpop.f32.mrf.mxu0
      %v580 = vadd.f32 %v300, %v579
      %581 = vmatmul.f32.gmra.mxu0 %v370
      %v582 = vpop.f32.mrf.mxu0
      %v583 = vadd.f32 %v300, %v582
      %584 = vmatmul.f32.gmra.mxu0 %v373
      %v585 = vpop.f32.mrf.mxu0
      %v586 = vadd.f32 %v300, %v585
      %587 = vmatmul.f32.gmra.mxu0 %v376
      %v588 = vpop.f32.mrf.mxu0
      %v589 = vadd.f32 %v300, %v588
      %590 = vmatmul.f32.gmra.mxu0 %v379
      %v591 = vpop.f32.mrf.mxu0
      %v592 = vadd.f32 %v300, %v591
      %593 = vmatmul.f32.gmra.mxu0 %v382
      %v594 = vpop.f32.mrf.mxu0
      %v595 = vadd.f32 %v300, %v594
      %596 = vmatmul.f32.gmra.mxu0 %v385
      %v597 = vpop.f32.mrf.mxu0
      %v598 = vadd.f32 %v300, %v597
      %599 = vmatmul.f32.gmra.mxu0 %v388
      %v600 = vpop.f32.mrf.mxu0
      %v601 = vadd.f32 %v300, %v600
      %602 = vmatmul.f32.gmra.mxu0 %v391
      %v603 = vpop.f32.mrf.mxu0
      %v604 = vadd.f32 %v300, %v603
      %605 = vmatmul.f32.gmra.mxu0 %v394
      %v606 = vpop.f32.mrf.mxu0
      %v607 = vadd.f32 %v300, %v606
      %608 = vmatmul.f32.gmra.mxu0 %v397
      %v609 = vpop.f32.mrf.mxu0
      %v610 = vadd.f32 %v300, %v609
      %611 = vmatmul.f32.gmra.mxu0 %v400
      %v612 = vpop.f32.mrf.mxu0
      %v613 = vadd.f32 %v300, %v612
      %614 = vmatmul.f32.gmra.mxu0 %v403
      %v615 = vpop.f32.mrf.mxu0
      %v616 = vadd.f32 %v300, %v615
      %617 = vmatmul.f32.gmra.mxu0 %v406
      %v618 = vpop.f32.mrf.mxu0
      %v619 = vadd.f32 %v300, %v618
      %620 = vmatmul.f32.gmra.mxu0 %v409
      %v621 = vpop.f32.mrf.mxu0
      %v622 = vadd.f32 %v300, %v621
      %623 = vmatmul.f32.gmra.mxu0 %v412
      %v624 = vpop.f32.mrf.mxu0
      %v625 = vadd.f32 %v300, %v624
      %626 = vmatmul.f32.gmra.mxu0 %v415
      %v627 = vpop.f32.mrf.mxu0
      %v628 = vadd.f32 %v300, %v627
      %629 = vmatmul.f32.gmra.mxu0 %v418
      %v630 = vpop.f32.mrf.mxu0
      %v631 = vadd.f32 %v300, %v630
      %632 = vmatmul.f32.gmra.mxu0 %v421
      %v633 = vpop.f32.mrf.mxu0
      %v634 = vadd.f32 %v300, %v633
      %635 = vmatmul.f32.gmra.mxu0 %v424
      %v636 = vpop.f32.mrf.mxu0
      %v637 = vadd.f32 %v300, %v636
      %638 = vmatmul.f32.gmra.mxu0 %v427
      %v639 = vpop.f32.mrf.mxu0
      %v640 = vadd.f32 %v300, %v639
      %641 = vmatmul.f32.gmra.mxu0 %v430
      %v642 = vpop.f32.mrf.mxu0
      %v643 = vadd.f32 %v300, %v642
      %644 = vmatmul.f32.gmra.mxu0 %v433
      %v645 = vpop.f32.mrf.mxu0
      %v646 = vadd.f32 %v300, %v645
      %647 = vmatmul.f32.gmra.mxu0 %v436
      %v648 = vpop.f32.mrf.mxu0
      %v649 = vadd.f32 %v300, %v648
      %650 = vmatmul.f32.gmra.mxu0 %v439
      %v651 = vpop.f32.mrf.mxu0
      %v652 = vadd.f32 %v300, %v651
      %653 = vmatmul.f32.gmra.mxu0 %v442
      %v654 = vpop.f32.mrf.mxu0
      %v655 = vadd.f32 %v300, %v654
      %656 = vmatmul.f32.gmra.mxu0 %v445
      %v657 = vpop.f32.mrf.mxu0
      %v658 = vadd.f32 %v300, %v657
      %659 = vmatmul.f32.gmra.mxu0 %v448
      %v660 = vpop.f32.mrf.mxu0
      %v661 = vadd.f32 %v300, %v660
      %662 = vmatmul.f32.gmra.mxu0 %v451
      %v663 = vpop.f32.mrf.mxu0
      %v664 = vadd.f32 %v300, %v663
      %665 = vmatmul.f32.gmra.mxu0 %v454
      %v666 = vpop.f32.mrf.mxu0
      %v667 = vadd.f32 %v300, %v666
      %668 = vmatmul.f32.gmra.mxu0 %v457
      %v669 = vpop.f32.mrf.mxu0
      %v670 = vadd.f32 %v300, %v669
      %671 = vmatmul.f32.gmra.mxu0 %v460
      %v672 = vpop.f32.mrf.mxu0
      %v673 = vadd.f32 %v300, %v672
      %674 = vmatmul.f32.gmra.mxu0 %v463
      %v675 = vpop.f32.mrf.mxu0
      %v676 = vadd.f32 %v300, %v675
      %677 = vmatmul.f32.gmra.mxu0 %v466
      %v678 = vpop.f32.mrf.mxu0
      %v679 = vadd.f32 %v300, %v678
      %680 = vmatmul.f32.gmra.mxu0 %v469
      %v681 = vpop.f32.mrf.mxu0
      %v682 = vadd.f32 %v300, %v681
      %683 = vmatmul.f32.gmra.mxu0 %v472
      %v684 = vpop.f32.mrf.mxu0
      %v685 = vadd.f32 %v300, %v684
      %686 = vmatmul.f32.gmra.mxu0 %v475
      %v687 = vpop.f32.mrf.mxu0
      %v688 = vadd.f32 %v300, %v687
      %689 = vmatmul.f32.gmra.mxu0 %v478
      %v690 = vpop.f32.mrf.mxu0
      %v691 = vadd.f32 %v300, %v690
      %692 = vmatmul.f32.gmra.mxu0 %v481
      %v693 = vpop.f32.mrf.mxu0
      %v694 = vadd.f32 %v300, %v693
      %695 = vmatmul.f32.gmra.mxu0 %v484
      %v696 = vpop.f32.mrf.mxu0
      %v697 = vadd.f32 %v300, %v696
      %698 = vmatmul.f32.gmra.mxu0 %v487
      %v699 = vpop.f32.mrf.mxu0
      %v700 = vadd.f32 %v300, %v699
      %701 = vmatmul.f32.gmra.mxu0 %v490
      %v702 = vpop.f32.mrf.mxu0
      %v703 = vadd.f32 %v300, %v702
      %704 = vmatmul.f32.gmra.mxu0 %v493
      %v705 = vpop.f32.mrf.mxu0
      %v706 = vadd.f32 %v300, %v705
      %707 = vdwg.mxu0
      %v708 = vtanh.pop %v517
      %v709 = vtanh.pop %v520
      %v710 = vtanh.pop %v523
      %v711 = vtanh.pop %v526
      %v712 = vtanh.pop %v529
      %v713 = vtanh.pop %v532
      %v714 = vtanh.pop %v535
      %v715 = vtanh.pop %v538
      %v716 = vtanh.pop %v541
      %v717 = vtanh.pop %v544
      %v718 = vtanh.pop %v547
      %v719 = vtanh.pop %v550
      %v720 = vtanh.pop %v553
      %v721 = vtanh.pop %v556
      %v722 = vtanh.pop %v559
      %v723 = vtanh.pop %v562
      %v724 = vtanh.pop %v565
      %v725 = vtanh.pop %v568
      %v726 = vtanh.pop %v571
      %v727 = vtanh.pop %v574
      %v728 = vtanh.pop %v577
      %v729 = vtanh.pop %v580
      %v730 = vtanh.pop %v583
      %v731 = vtanh.pop %v586
      %v732 = vtanh.pop %v589
      %v733 = vtanh.pop %v592
      %v734 = vtanh.pop %v595
      %v735 = vtanh.pop %v598
      %v736 = vtanh.pop %v601
      %v737 = vtanh.pop %v604
      %v738 = vtanh.pop %v607
      %v739 = vtanh.pop %v610
      %v740 = vtanh.pop %v613
      %v741 = vtanh.pop %v616
      %v742 = vtanh.pop %v619
      %v743 = vtanh.pop %v622
      %v744 = vtanh.pop %v625
      %v745 = vtanh.pop %v628
      %v746 = vtanh.pop %v631
      %v747 = vtanh.pop %v634
      %v748 = vtanh.pop %v637
      %v749 = vtanh.pop %v640
      %v750 = vtanh.pop %v643
      %v751 = vtanh.pop %v646
      %v752 = vtanh.pop %v649
      %v753 = vtanh.pop %v652
      %v754 = vtanh.pop %v655
      %v755 = vtanh.pop %v658
      %v756 = vtanh.pop %v661
      %v757 = vtanh.pop %v664
      %v758 = vtanh.pop %v667
      %v759 = vtanh.pop %v670
      %v760 = vtanh.pop %v673
      %v761 = vtanh.pop %v676
      %v762 = vtanh.pop %v679
      %v763 = vtanh.pop %v682
      %v764 = vtanh.pop %v685
      %v765 = vtanh.pop %v688
      %v766 = vtanh.pop %v691
      %v767 = vtanh.pop %v694
      %v768 = vtanh.pop %v697
      %v769 = vtanh.pop %v700
      %v770 = vtanh.pop %v703
      %v771 = vtanh.pop %v706
      %v773 = vperm.slane %v234, 0
      %vm775 = vcmask 261120
      %v777 = vsel %vm775, %v708, 0
      %v780 = vsel %vm775, %v709, 0
      %v783 = vsel %vm775, %v710, 0
      %v786 = vsel %vm775, %v711, 0
      %v789 = vsel %vm775, %v712, 0
      %v792 = vsel %vm775, %v713, 0
      %v795 = vsel %vm775, %v714, 0
      %v798 = vsel %vm775, %v715, 0
      %v801 = vsel %vm775, %v716, 0
      %v804 = vsel %vm775, %v717, 0
      %v807 = vsel %vm775, %v718, 0
      %v810 = vsel %vm775, %v719, 0
      %v813 = vsel %vm775, %v720, 0
      %v816 = vsel %vm775, %v721, 0
      %v819 = vsel %vm775, %v722, 0
      %v822 = vsel %vm775, %v723, 0
      %v825 = vsel %vm775, %v724, 0
      %v828 = vsel %vm775, %v725, 0
      %v831 = vsel %vm775, %v726, 0
      %v834 = vsel %vm775, %v727, 0
      %v837 = vsel %vm775, %v728, 0
      %v840 = vsel %vm775, %v729, 0
      %v843 = vsel %vm775, %v730, 0
      %v846 = vsel %vm775, %v731, 0
      %v849 = vsel %vm775, %v732, 0
      %v852 = vsel %vm775, %v733, 0
      %v855 = vsel %vm775, %v734, 0
      %v858 = vsel %vm775, %v735, 0
      %v861 = vsel %vm775, %v736, 0
      %v864 = vsel %vm775, %v737, 0
      %v867 = vsel %vm775, %v738, 0
      %v870 = vsel %vm775, %v739, 0
      %v873 = vsel %vm775, %v740, 0
      %v876 = vsel %vm775, %v741, 0
      %v879 = vsel %vm775, %v742, 0
      %v882 = vsel %vm775, %v743, 0
      %v885 = vsel %vm775, %v744, 0
      %v888 = vsel %vm775, %v745, 0
      %v891 = vsel %vm775, %v746, 0
      %v894 = vsel %vm775, %v747, 0
      %v897 = vsel %vm775, %v748, 0
      %v900 = vsel %vm775, %v749, 0
      %v903 = vsel %vm775, %v750, 0
      %v906 = vsel %vm775, %v751, 0
      %v909 = vsel %vm775, %v752, 0
      %v912 = vsel %vm775, %v753, 0
      %v915 = vsel %vm775, %v754, 0
      %v918 = vsel %vm775, %v755, 0
      %v921 = vsel %vm775, %v756, 0
      %v924 = vsel %vm775, %v757, 0
      %v927 = vsel %vm775, %v758, 0
      %v930 = vsel %vm775, %v759, 0
      %v933 = vsel %vm775, %v760, 0
      %v936 = vsel %vm775, %v761, 0
      %v939 = vsel %vm775, %v762, 0
      %v942 = vsel %vm775, %v763, 0
      %v945 = vsel %vm775, %v764, 0
      %v948 = vsel %vm775, %v765, 0
      %v951 = vsel %vm775, %v766, 0
      %v954 = vsel %vm775, %v767, 0
      %v957 = vsel %vm775, %v768, 0
      %v960 = vsel %vm775, %v769, 0
      %v963 = vsel %vm775, %v770, 0
      %v966 = vsel %vm775, %v771, 0
      %968 = vmatpush.msra.mxu0 0.0
      %969 = vmatpush.msra.mxu0 0.0
      %970 = vmatpush.msra.mxu0 0.0
      %971 = vmatpush.msra.mxu0 0.0
      %972 = vmatpush.msra.mxu0 0.0
      %973 = vmatpush.msra.mxu0 0.0
      %974 = vmatpush.msra.mxu0 0.0
      %975 = vmatpush.msra.mxu0 0.0
      %976 = vmatpush.msra.mxu0 0.0
      %977 = vmatpush.msra.mxu0 0.0
      %978 = vmatpush.msra.mxu0 0.0
      %979 = vmatpush.msra.mxu0 0.0
      %980 = vmatpush.msra.mxu0 %v232
      %981 = vmatpush.msra.mxu0 %v231
      %982 = vmatpush.msra.mxu0 %v230
      %983 = vmatpush.msra.mxu0 %v229
      %984 = vmatmul.f32.gmra.mxu0 %v777
      %v985 = vpop.f32.mrf.mxu0
      %v986 = vadd.f32 %v773, %v985
      %987 = vmatmul.f32.gmra.mxu0 %v780
      %v988 = vpop.f32.mrf.mxu0
      %v989 = vadd.f32 %v773, %v988
      %990 = vmatmul.f32.gmra.mxu0 %v783
      %v991 = vpop.f32.mrf.mxu0
      %v992 = vadd.f32 %v773, %v991
      %993 = vmatmul.f32.gmra.mxu0 %v786
      %v994 = vpop.f32.mrf.mxu0
      %v995 = vadd.f32 %v773, %v994
      %996 = vmatmul.f32.gmra.mxu0 %v789
      %v997 = vpop.f32.mrf.mxu0
      %v998 = vadd.f32 %v773, %v997
      %999 = vmatmul.f32.gmra.mxu0 %v792
      %v1000 = vpop.f32.mrf.mxu0
      %v1001 = vadd.f32 %v773, %v1000
      %1002 = vmatmul.f32.gmra.mxu0 %v795
      %v1003 = vpop.f32.mrf.mxu0
      %v1004 = vadd.f32 %v773, %v1003
      %1005 = vmatmul.f32.gmra.mxu0 %v798
      %v1006 = vpop.f32.mrf.mxu0
      %v1007 = vadd.f32 %v773, %v1006
      %1008 = vmatmul.f32.gmra.mxu0 %v801
      %v1009 = vpop.f32.mrf.mxu0
      %v1010 = vadd.f32 %v773, %v1009
      %1011 = vmatmul.f32.gmra.mxu0 %v804
      %v1012 = vpop.f32.mrf.mxu0
      %v1013 = vadd.f32 %v773, %v1012
      %1014 = vmatmul.f32.gmra.mxu0 %v807
      %v1015 = vpop.f32.mrf.mxu0
      %v1016 = vadd.f32 %v773, %v1015
      %1017 = vmatmul.f32.gmra.mxu0 %v810
      %v1018 = vpop.f32.mrf.mxu0
      %v1019 = vadd.f32 %v773, %v1018
      %1020 = vmatmul.f32.gmra.mxu0 %v813
      %v1021 = vpop.f32.mrf.mxu0
      %v1022 = vadd.f32 %v773, %v1021
      %1023 = vmatmul.f32.gmra.mxu0 %v816
      %v1024 = vpop.f32.mrf.mxu0
      %v1025 = vadd.f32 %v773, %v1024
      %1026 = vmatmul.f32.gmra.mxu0 %v819
      %v1027 = vpop.f32.mrf.mxu0
      %v1028 = vadd.f32 %v773, %v1027
      %1029 = vmatmul.f32.gmra.mxu0 %v822
      %v1030 = vpop.f32.mrf.mxu0
      %v1031 = vadd.f32 %v773, %v1030
      %1032 = vmatmul.f32.gmra.mxu0 %v825
      %v1033 = vpop.f32.mrf.mxu0
      %v1034 = vadd.f32 %v773, %v1033
      %1035 = vmatmul.f32.gmra.mxu0 %v828
      %v1036 = vpop.f32.mrf.mxu0
      %v1037 = vadd.f32 %v773, %v1036
      %1038 = vmatmul.f32.gmra.mxu0 %v831
      %v1039 = vpop.f32.mrf.mxu0
      %v1040 = vadd.f32 %v773, %v1039
      %1041 = vmatmul.f32.gmra.mxu0 %v834
      %v1042 = vpop.f32.mrf.mxu0
      %v1043 = vadd.f32 %v773, %v1042
      %1044 = vmatmul.f32.gmra.mxu0 %v837
      %v1045 = vpop.f32.mrf.mxu0
      %v1046 = vadd.f32 %v773, %v1045
      %1047 = vmatmul.f32.gmra.mxu0 %v840
      %v1048 = vpop.f32.mrf.mxu0
      %v1049 = vadd.f32 %v773, %v1048
      %1050 = vmatmul.f32.gmra.mxu0 %v843
      %v1051 = vpop.f32.mrf.mxu0
      %v1052 = vadd.f32 %v773, %v1051
      %1053 = vmatmul.f32.gmra.mxu0 %v846
      %v1054 = vpop.f32.mrf.mxu0
      %v1055 = vadd.f32 %v773, %v1054
      %1056 = vmatmul.f32.gmra.mxu0 %v849
      %v1057 = vpop.f32.mrf.mxu0
      %v1058 = vadd.f32 %v773, %v1057
      %1059 = vmatmul.f32.gmra.mxu0 %v852
      %v1060 = vpop.f32.mrf.mxu0
      %v1061 = vadd.f32 %v773, %v1060
      %1062 = vmatmul.f32.gmra.mxu0 %v855
      %v1063 = vpop.f32.mrf.mxu0
      %v1064 = vadd.f32 %v773, %v1063
      %1065 = vmatmul.f32.gmra.mxu0 %v858
      %v1066 = vpop.f32.mrf.mxu0
      %v1067 = vadd.f32 %v773, %v1066
      %1068 = vmatmul.f32.gmra.mxu0 %v861
      %v1069 = vpop.f32.mrf.mxu0
      %v1070 = vadd.f32 %v773, %v1069
      %1071 = vmatmul.f32.gmra.mxu0 %v864
      %v1072 = vpop.f32.mrf.mxu0
      %v1073 = vadd.f32 %v773, %v1072
      %1074 = vmatmul.f32.gmra.mxu0 %v867
      %v1075 = vpop.f32.mrf.mxu0
      %v1076 = vadd.f32 %v773, %v1075
      %1077 = vmatmul.f32.gmra.mxu0 %v870
      %v1078 = vpop.f32.mrf.mxu0
      %v1079 = vadd.f32 %v773, %v1078
      %1080 = vmatmul.f32.gmra.mxu0 %v873
      %v1081 = vpop.f32.mrf.mxu0
      %v1082 = vadd.f32 %v773, %v1081
      %1083 = vmatmul.f32.gmra.mxu0 %v876
      %v1084 = vpop.f32.mrf.mxu0
      %v1085 = vadd.f32 %v773, %v1084
      %1086 = vmatmul.f32.gmra.mxu0 %v879
      %v1087 = vpop.f32.mrf.mxu0
      %v1088 = vadd.f32 %v773, %v1087
      %1089 = vmatmul.f32.gmra.mxu0 %v882
      %v1090 = vpop.f32.mrf.mxu0
      %v1091 = vadd.f32 %v773, %v1090
      %1092 = vmatmul.f32.gmra.mxu0 %v885
      %v1093 = vpop.f32.mrf.mxu0
      %v1094 = vadd.f32 %v773, %v1093
      %1095 = vmatmul.f32.gmra.mxu0 %v888
      %v1096 = vpop.f32.mrf.mxu0
      %v1097 = vadd.f32 %v773, %v1096
      %1098 = vmatmul.f32.gmra.mxu0 %v891
      %v1099 = vpop.f32.mrf.mxu0
      %v1100 = vadd.f32 %v773, %v1099
      %1101 = vmatmul.f32.gmra.mxu0 %v894
      %v1102 = vpop.f32.mrf.mxu0
      %v1103 = vadd.f32 %v773, %v1102
      %1104 = vmatmul.f32.gmra.mxu0 %v897
      %v1105 = vpop.f32.mrf.mxu0
      %v1106 = vadd.f32 %v773, %v1105
      %1107 = vmatmul.f32.gmra.mxu0 %v900
      %v1108 = vpop.f32.mrf.mxu0
      %v1109 = vadd.f32 %v773, %v1108
      %1110 = vmatmul.f32.gmra.mxu0 %v903
      %v1111 = vpop.f32.mrf.mxu0
      %v1112 = vadd.f32 %v773, %v1111
      %1113 = vmatmul.f32.gmra.mxu0 %v906
      %v1114 = vpop.f32.mrf.mxu0
      %v1115 = vadd.f32 %v773, %v1114
      %1116 = vmatmul.f32.gmra.mxu0 %v909
      %v1117 = vpop.f32.mrf.mxu0
      %v1118 = vadd.f32 %v773, %v1117
      %1119 = vmatmul.f32.gmra.mxu0 %v912
      %v1120 = vpop.f32.mrf.mxu0
      %v1121 = vadd.f32 %v773, %v1120
      %1122 = vmatmul.f32.gmra.mxu0 %v915
      %v1123 = vpop.f32.mrf.mxu0
      %v1124 = vadd.f32 %v773, %v1123
      %1125 = vmatmul.f32.gmra.mxu0 %v918
      %v1126 = vpop.f32.mrf.mxu0
      %v1127 = vadd.f32 %v773, %v1126
      %1128 = vmatmul.f32.gmra.mxu0 %v921
      %v1129 = vpop.f32.mrf.mxu0
      %v1130 = vadd.f32 %v773, %v1129
      %1131 = vmatmul.f32.gmra.mxu0 %v924
      %v1132 = vpop.f32.mrf.mxu0
      %v1133 = vadd.f32 %v773, %v1132
      %1134 = vmatmul.f32.gmra.mxu0 %v927
      %v1135 = vpop.f32.mrf.mxu0
      %v1136 = vadd.f32 %v773, %v1135
      %1137 = vmatmul.f32.gmra.mxu0 %v930
      %v1138 = vpop.f32.mrf.mxu0
      %v1139 = vadd.f32 %v773, %v1138
      %1140 = vmatmul.f32.gmra.mxu0 %v933
      %v1141 = vpop.f32.mrf.mxu0
      %v1142 = vadd.f32 %v773, %v1141
      %1143 = vmatmul.f32.gmra.mxu0 %v936
      %v1144 = vpop.f32.mrf.mxu0
      %v1145 = vadd.f32 %v773, %v1144
      %1146 = vmatmul.f32.gmra.mxu0 %v939
      %v1147 = vpop.f32.mrf.mxu0
      %v1148 = vadd.f32 %v773, %v1147
      %1149 = vmatmul.f32.gmra.mxu0 %v942
      %v1150 = vpop.f32.mrf.mxu0
      %v1151 = vadd.f32 %v773, %v1150
      %1152 = vmatmul.f32.gmra.mxu0 %v945
      %v1153 = vpop.f32.mrf.mxu0
      %v1154 = vadd.f32 %v773, %v1153
      %1155 = vmatmul.f32.gmra.mxu0 %v948
      %v1156 = vpop.f32.mrf.mxu0
      %v1157 = vadd.f32 %v773, %v1156
      %1158 = vmatmul.f32.gmra.mxu0 %v951
      %v1159 = vpop.f32.mrf.mxu0
      %v1160 = vadd.f32 %v773, %v1159
      %1161 = vmatmul.f32.gmra.mxu0 %v954
      %v1162 = vpop.f32.mrf.mxu0
      %v1163 = vadd.f32 %v773, %v1162
      %1164 = vmatmul.f32.gmra.mxu0 %v957
      %v1165 = vpop.f32.mrf.mxu0
      %v1166 = vadd.f32 %v773, %v1165
      %1167 = vmatmul.f32.gmra.mxu0 %v960
      %v1168 = vpop.f32.mrf.mxu0
      %v1169 = vadd.f32 %v773, %v1168
      %1170 = vmatmul.f32.gmra.mxu0 %v963
      %v1171 = vpop.f32.mrf.mxu0
      %v1172 = vadd.f32 %v773, %v1171
      %1173 = vmatmul.f32.gmra.mxu0 %v966
      %v1174 = vpop.f32.mrf.mxu0
      %v1175 = vadd.f32 %v773, %v1174
      %1176 = vdwg.mxu0
      %vm1177 = vcmask 15360
      %1178 = vst.msk [vmem:[%s226] sm:$0xff] %vm1177, %v986
      %1179 = vst.msk [vmem:[%s226 + $0x8] sm:$0xff] %vm1177, %v989
      %1180 = vst.msk [vmem:[%s226 + $0x10] sm:$0xff] %vm1177, %v992
      %1181 = vst.msk [vmem:[%s226 + $0x18] sm:$0xff] %vm1177, %v995
      %1182 = vst.msk [vmem:[%s226 + $0x20] sm:$0xff] %vm1177, %v998
      %1183 = vst.msk [vmem:[%s226 + $0x28] sm:$0xff] %vm1177, %v1001
      %1184 = vst.msk [vmem:[%s226 + $0x30] sm:$0xff] %vm1177, %v1004
      %1185 = vst.msk [vmem:[%s226 + $0x38] sm:$0xff] %vm1177, %v1007
      %1186 = vst.msk [vmem:[%s226 + $0x40] sm:$0xff] %vm1177, %v1010
      %1187 = vst.msk [vmem:[%s226 + $0x48] sm:$0xff] %vm1177, %v1013
      %1188 = vst.msk [vmem:[%s226 + $0x50] sm:$0xff] %vm1177, %v1016
      %1189 = vst.msk [vmem:[%s226 + $0x58] sm:$0xff] %vm1177, %v1019
      %1190 = vst.msk [vmem:[%s226 + $0x60] sm:$0xff] %vm1177, %v1022
      %1191 = vst.msk [vmem:[%s226 + $0x68] sm:$0xff] %vm1177, %v1025
      %1192 = vst.msk [vmem:[%s226 + $0x70] sm:$0xff] %vm1177, %v1028
      %1193 = vst.msk [vmem:[%s226 + $0x78] sm:$0xff] %vm1177, %v1031
      %1194 = vst.msk [vmem:[%s226 + $0x80] sm:$0xff] %vm1177, %v1034
      %1195 = vst.msk [vmem:[%s226 + $0x88] sm:$0xff] %vm1177, %v1037
      %1196 = vst.msk [vmem:[%s226 + $0x90] sm:$0xff] %vm1177, %v1040
      %1197 = vst.msk [vmem:[%s226 + $0x98] sm:$0xff] %vm1177, %v1043
      %1198 = vst.msk [vmem:[%s226 + $0xa0] sm:$0xff] %vm1177, %v1046
      %1199 = vst.msk [vmem:[%s226 + $0xa8] sm:$0xff] %vm1177, %v1049
      %1200 = vst.msk [vmem:[%s226 + $0xb0] sm:$0xff] %vm1177, %v1052
      %1201 = vst.msk [vmem:[%s226 + $0xb8] sm:$0xff] %vm1177, %v1055
      %1202 = vst.msk [vmem:[%s226 + $0xc0] sm:$0xff] %vm1177, %v1058
      %1203 = vst.msk [vmem:[%s226 + $0xc8] sm:$0xff] %vm1177, %v1061
      %1204 = vst.msk [vmem:[%s226 + $0xd0] sm:$0xff] %vm1177, %v1064
      %1205 = vst.msk [vmem:[%s226 + $0xd8] sm:$0xff] %vm1177, %v1067
      %1206 = vst.msk [vmem:[%s226 + $0xe0] sm:$0xff] %vm1177, %v1070
      %1207 = vst.msk [vmem:[%s226 + $0xe8] sm:$0xff] %vm1177, %v1073
      %1208 = vst.msk [vmem:[%s226 + $0xf0] sm:$0xff] %vm1177, %v1076
      %1209 = vst.msk [vmem:[%s226 + $0xf8] sm:$0xff] %vm1177, %v1079
      %1210 = vst.msk [vmem:[%s226 + $0x100] sm:$0xff] %vm1177, %v1082
      %1211 = vst.msk [vmem:[%s226 + $0x108] sm:$0xff] %vm1177, %v1085
      %1212 = vst.msk [vmem:[%s226 + $0x110] sm:$0xff] %vm1177, %v1088
      %1213 = vst.msk [vmem:[%s226 + $0x118] sm:$0xff] %vm1177, %v1091
      %1214 = vst.msk [vmem:[%s226 + $0x120] sm:$0xff] %vm1177, %v1094
      %1215 = vst.msk [vmem:[%s226 + $0x128] sm:$0xff] %vm1177, %v1097
      %1216 = vst.msk [vmem:[%s226 + $0x130] sm:$0xff] %vm1177, %v1100
      %1217 = vst.msk [vmem:[%s226 + $0x138] sm:$0xff] %vm1177, %v1103
      %1218 = vst.msk [vmem:[%s226 + $0x140] sm:$0xff] %vm1177, %v1106
      %1219 = vst.msk [vmem:[%s226 + $0x148] sm:$0xff] %vm1177, %v1109
      %1220 = vst.msk [vmem:[%s226 + $0x150] sm:$0xff] %vm1177, %v1112
      %1221 = vst.msk [vmem:[%s226 + $0x158] sm:$0xff] %vm1177, %v1115
      %1222 = vst.msk [vmem:[%s226 + $0x160] sm:$0xff] %vm1177, %v1118
      %1223 = vst.msk [vmem:[%s226 + $0x168] sm:$0xff] %vm1177, %v1121
      %1224 = vst.msk [vmem:[%s226 + $0x170] sm:$0xff] %vm1177, %v1124
      %1225 = vst.msk [vmem:[%s226 + $0x178] sm:$0xff] %vm1177, %v1127
      %1226 = vst.msk [vmem:[%s226 + $0x180] sm:$0xff] %vm1177, %v1130
      %1227 = vst.msk [vmem:[%s226 + $0x188] sm:$0xff] %vm1177, %v1133
      %1228 = vst.msk [vmem:[%s226 + $0x190] sm:$0xff] %vm1177, %v1136
      %1229 = vst.msk [vmem:[%s226 + $0x198] sm:$0xff] %vm1177, %v1139
      %1230 = vst.msk [vmem:[%s226 + $0x1a0] sm:$0xff] %vm1177, %v1142
      %1231 = vst.msk [vmem:[%s226 + $0x1a8] sm:$0xff] %vm1177, %v1145
      %1232 = vst.msk [vmem:[%s226 + $0x1b0] sm:$0xff] %vm1177, %v1148
      %1233 = vst.msk [vmem:[%s226 + $0x1b8] sm:$0xff] %vm1177, %v1151
      %1234 = vst.msk [vmem:[%s226 + $0x1c0] sm:$0xff] %vm1177, %v1154
      %1235 = vst.msk [vmem:[%s226 + $0x1c8] sm:$0xff] %vm1177, %v1157
      %1236 = vst.msk [vmem:[%s226 + $0x1d0] sm:$0xff] %vm1177, %v1160
      %1237 = vst.msk [vmem:[%s226 + $0x1d8] sm:$0xff] %vm1177, %v1163
      %1238 = vst.msk [vmem:[%s226 + $0x1e0] sm:$0xff] %vm1177, %v1166
      %1239 = vst.msk [vmem:[%s226 + $0x1e8] sm:$0xff] %vm1177, %v1169
      %1240 = vst.msk [vmem:[%s226 + $0x1f0] sm:$0xff] %vm1177, %v1172
      %1241 = vst.msk [vmem:[%s226 + $0x1f8] sm:$0xff] %vm1177, %v1175
      %s1242 = smul.u32 64, %s16
      %p1243 = scmp.lt.s32.totalorder %s1242, 127
      %s1244 = scalar_select %p1243, %s1242, 127
      %s1245 = smul.addr %s1244, 8
      %s1246 = scalar_lea.vmem %s5, %s1245
      // Predicated region
      $region41: #{tpu_custom_call.1} parent=39 // pred_check
        %p1247 = pneg %p144
      $region42: #{tpu_custom_call.1} parent=39 // pred_check_branch
        %1249 = sbr.rel (%p1247) target = $region44
      $region43: #{tpu_custom_call.1} parent=39 // pred_region
        %s1250 = smul.u32 64, %s16
      $region44: #{tpu_custom_call.1} parent=39 // pred_fallthru
        _
    $region40: #{tpu_custom_call.1} parent=5 // pred_fallthru
      _
    %p1251 = scmp.le.s32.totalorder 2, %s11
    // Predicated region
    $region45: #{tpu_custom_call.1} parent=5 // pred_check
      %p1252 = pneg %p1251
    $region46: #{tpu_custom_call.1} parent=5 // pred_check_branch
      %1254 = sbr.rel (%p1252) target = $region48
    $region47: #{tpu_custom_call.1} parent=5 // pred_region
      %s1255 = ssub.s32 %s11, 2
      // Predicated region
      $region49: #{tpu_custom_call.1} parent=47 // pred_check
        %p1256 = pneg %p150
      $region50: #{tpu_custom_call.1} parent=47 // pred_check_branch
        %1258 = sbr.rel (%p1256) target = $region52
      $region51: #{tpu_custom_call.1} parent=47 // pred_region
        %s1259 = smul.u32 64, %s17
        %p1260 = scmp.lt.s32.totalorder %s1259, 127
        %s1261 = scalar_select %p1260, %s1259, 127
        %s1262 = smul.addr %s1261, 8
        %s1263 = scalar_lea.vmem %s5, %s1262
      $region52: #{tpu_custom_call.1} parent=47 // pred_fallthru
        _
    $region48: #{tpu_custom_call.1} parent=5 // pred_fallthru
      _
  $region6: #{tpu_custom_call.1} parent=0 // loop_footer
    %s15 = sadd.s32 1, %s11
  $region7: #{tpu_custom_call.1} parent=0 // loop_footer_branch
    %10 = sbr.rel target = $region3
  $region8: #{tpu_custom_call.1} parent=0 // loop_exit
    _

</llo_original>
